<compile_context>
chip_gen: v7x
topology: tpu7x:2x2x1
jax: 0.10.0
libtpu: 0.0.40
codegen_flags: <defaults>
</compile_context>

<pallas_src>
import functools

import jax
import jax.numpy as jnp
from jax.experimental import pallas as pl
from jax.experimental.pallas import tpu as pltpu


def _round_up(x, m):
    return (x + m - 1) // m * m


def _argmax_kernel(c_ref, ent_ref, score_ref, idx_ref,
                   best_score_ref, best_idx_ref, *,
                   n_rows, steps_per_part, tile_rows):
    """Streaming vectorized argmax of <entity_row, c> over row tiles.

    c_ref         : (D, 128)        coefficient vector replicated across lanes (resident)
    ent_ref       : (tile, D)       current entity tile (streamed from HBM)
    score_ref     : (8, 128) f32    per-partition best score output
    idx_ref       : (8, 128) i32    per-partition best index output
    best_*_ref    : (tile, 128)     vectorized running best, carried across steps
    """
    p = pl.program_id(0)   # partition (parallel; maps to TensorCores on v7x)
    j = pl.program_id(1)   # streaming step within the partition

    @pl.when(j == 0)
    def _init():
        best_score_ref[...] = jnp.full(best_score_ref.shape, -jnp.inf, jnp.float32)
        best_idx_ref[...] = jnp.zeros(best_idx_ref.shape, jnp.int32)

    # Scores on the MXU (mem-bound kernel -> MXU is free).  c is replicated
    # across the 128 columns so every lane of a row carries the same score;
    # accumulation is f32 without up-casting the whole tile.
    scores = jnp.dot(ent_ref[...], c_ref[...],
                     preferred_element_type=jnp.float32)          # (tile, 128)

    base = (p * steps_per_part + j) * tile_rows
    row = jax.lax.broadcasted_iota(jnp.int32, scores.shape, 0)
    gidx = base + row
    scores = jnp.where(gidx < n_rows, scores, -jnp.inf)            # tail / phantom mask

    # Vectorized running best: pure VPU compare/select, overlaps with DMA.
    # Strict '>' keeps the earliest row of a slot on ties.
    better = scores > best_score_ref[...]
    best_idx_ref[...] = jnp.where(better, gidx, best_idx_ref[...])
    best_score_ref[...] = jnp.where(better, scores, best_score_ref[...])

    # Single cross-lane/sublane reduce per partition (not per tile).
    @pl.when(j == steps_per_part - 1)
    def _finalize():
        bs = best_score_ref[...]
        bi = best_idx_ref[...]
        gmax = jnp.max(bs)
        cand = jnp.where(bs == gmax, bi, jnp.int32(n_rows))
        gbest = jnp.minimum(jnp.min(cand), jnp.int32(n_rows - 1))
        score_ref[...] = jnp.full(score_ref.shape, gmax, jnp.float32)
        idx_ref[...] = jnp.full(idx_ref.shape, gbest, jnp.int32)


def answer_filtering(head_entity, question_embedding, entity_embeddings,
                     *, num_partitions=2, vmem_budget_bytes=12 << 20):
    """Returns the embedding of the highest-scoring entity (shape [D])."""
    N, D = entity_embeddings.shape
    assert D % 2 == 0
    Dh = D // 2

    # Precompute the ComplEx coefficient vector once in f32, replicate across
    # 128 lanes so the MXU output is lane-dense with identical columns.
    h = head_entity.astype(jnp.float32)
    q = question_embedding.astype(jnp.float32)
    h_re, h_im = h[:Dh], h[Dh:]
    q_re, q_im = q[:Dh], q[Dh:]
    c = jnp.concatenate([h_re * q_re - h_im * q_im,
                         h_im * q_re + h_re * q_im])
    c_mat = jnp.broadcast_to(c[:, None], (D, 128)).astype(entity_embeddings.dtype)

    itemsize = entity_embeddings.dtype.itemsize
    sublane = max(8, 32 // itemsize)            # 8 f32 / 16 bf16 / 32 int8
    lane_d = _round_up(D, 128)                  # lane-padded width in VMEM

    # Row tile from a VMEM byte budget: double-buffered entity tile plus the
    # (tile,128) f32+i32 running-best carry.
    per_row_bytes = 2 * lane_d * itemsize + 2 * 128 * 4
    budget_rows = max(sublane, vmem_budget_bytes // per_row_bytes)
    if budget_rows >= N:
        tile_rows = N                           # one full-height tile
    else:
        tile_rows = max(sublane, (budget_rows // sublane) * sublane)

    n_blocks = pl.cdiv(N, tile_rows)
    n_parts = max(1, min(num_partitions, n_blocks))   # 2 -> dual-TC on v7x
    steps_per_part = pl.cdiv(n_blocks, n_parts)

    def ent_index_map(p, j):
        # Phantom trailing steps of the last partition re-read the last real
        # block; their rows are fully masked to -inf inside the kernel.
        return (jnp.minimum(p * steps_per_part + j, n_blocks - 1), 0)

    vmem_bytes = int(2 * tile_rows * lane_d * itemsize          # entity double buffer
                     + tile_rows * 128 * 8                      # f32 + i32 carry
                     + 2 * _round_up(D, 8) * 128 * itemsize     # resident c
                     + 4 * 8 * 128 * 8                          # tiny outputs
                     + (4 << 20))                               # headroom
    vmem_bytes = max(vmem_bytes, 8 << 20)

    kernel = functools.partial(_argmax_kernel, n_rows=N,
                               steps_per_part=steps_per_part,
                               tile_rows=tile_rows)

    score_out, idx_out = pl.pallas_call(
        kernel,
        out_shape=(jax.ShapeDtypeStruct((n_parts * 8, 128), jnp.float32),
                   jax.ShapeDtypeStruct((n_parts * 8, 128), jnp.int32)),
        grid_spec=pltpu.PrefetchScalarGridSpec(
            num_scalar_prefetch=0,
            grid=(n_parts, steps_per_part),
            in_specs=[
                pl.BlockSpec((D, 128), lambda p, j: (0, 0)),       # coefficients (resident)
                pl.BlockSpec((tile_rows, D), ent_index_map),       # entity tiles (streamed)
            ],
            out_specs=[
                pl.BlockSpec((8, 128), lambda p, j: (p, 0)),
                pl.BlockSpec((8, 128), lambda p, j: (p, 0)),
            ],
            scratch_shapes=[
                pltpu.VMEM((tile_rows, 128), jnp.float32),   # running best score
                pltpu.VMEM((tile_rows, 128), jnp.int32),     # running best index
            ],
        ),
        compiler_params=pltpu.CompilerParams(
            dimension_semantics=("parallel", "arbitrary"),
            vmem_limit_bytes=vmem_bytes,
        ),
    )(c_mat, entity_embeddings)

    # Reduce the per-partition partials; ties resolve to the lower partition
    # (= lower global index), preserving first-occurrence semantics.
    part_scores = score_out.reshape(n_parts, 8, 128)[:, 0, 0]
    part_idx = idx_out.reshape(n_parts, 8, 128)[:, 0, 0]
    best_part = jnp.argmax(part_scores)
    best_idx = jnp.clip(part_idx[best_part], 0, N - 1)
    # Single gather outside the hot loop (original dtype preserved).
    return entity_embeddings[best_idx]


if __name__ == "__main__":
    key = jax.random.PRNGKey(0)
    k1, k2, k3 = jax.random.split(key, 3)

    # Primary small-shape check (single tile, single partition).
    N, D = 256, 32
    entity_embeddings = jax.random.normal(k1, (N, D), dtype=jnp.float32)
    head_entity = jax.random.normal(k2, (D,), dtype=jnp.float32)
    question_embedding = jax.random.normal(k3, (D,), dtype=jnp.float32)

    out = answer_filtering(head_entity, question_embedding, entity_embeddings)
    out = jax.block_until_ready(out)

    Dh = D // 2
    a = head_entity[:Dh] * question_embedding[:Dh] - head_entity[Dh:] * question_embedding[Dh:]
    b = head_entity[Dh:] * question_embedding[:Dh] + head_entity[:Dh] * question_embedding[Dh:]
    scores = jnp.sum(entity_embeddings[:, :Dh] * a + entity_embeddings[:, Dh:] * b, axis=-1)
    ref = entity_embeddings[jnp.argmax(scores)]
    assert jnp.allclose(out, ref, atol=1e-5, rtol=1e-5), "mismatch vs reference"

    # Second check: small VMEM budget forces 128-row tiles, 2 partitions, a
    # phantom trailing step and a masked partial tail block.
    N2, D2 = 890, 96
    e2 = jax.random.normal(k1, (N2, D2), dtype=jnp.float32)
    h2 = jax.random.normal(k2, (D2,), dtype=jnp.float32)
    q2 = jax.random.normal(k3, (D2,), dtype=jnp.float32)
    out2 = jax.block_until_ready(
        answer_filtering(h2, q2, e2, vmem_budget_bytes=256 << 10))
    Dh2 = D2 // 2
    a2 = h2[:Dh2] * q2[:Dh2] - h2[Dh2:] * q2[Dh2:]
    b2 = h2[Dh2:] * q2[:Dh2] + h2[:Dh2] * q2[Dh2:]
    s2 = jnp.sum(e2[:, :Dh2] * a2 + e2[:, Dh2:] * b2, axis=-1)
    ref2 = e2[jnp.argmax(s2)]
    assert jnp.allclose(out2, ref2, atol=1e-5, rtol=1e-5), "mismatch vs reference (tiled)"

    print("KERNEL_OK")
</pallas_src>

<mosaic_0001>
module attributes {stable_mosaic.version = 11 : i64} {
  func.func @_argmax_kernel(%arg0: i32, %arg1: i32, %arg2: memref<32x128xf32, #tpu.memory_space<vmem>>, %arg3: memref<256x32xf32, #tpu.memory_space<vmem>>, %arg4: memref<8x128xf32, #tpu.memory_space<vmem>>, %arg5: memref<8x128xi32, #tpu.memory_space<vmem>>, %arg6: memref<256x128xf32, #tpu.memory_space<vmem>>, %arg7: memref<256x128xi32, #tpu.memory_space<vmem>>) attributes {dimension_semantics = [#tpu.dimension_semantics<parallel>, #tpu.dimension_semantics<arbitrary>], iteration_bounds = array<i64: 1, 1>, scalar_prefetch = 0 : i64, scratch_operands = 2 : i64, tpu.core_type = #tpu.core_type<tc>, window_params = [{pipeline_mode = #tpu.pipeline_mode<synchronous>, transform_indices = @transform_0, window_bounds = array<i64: 32, 128>}, {transform_indices = @transform_1, window_bounds = array<i64: 256, 32>}, {transform_indices = @transform_2, window_bounds = array<i64: 8, 128>}, {transform_indices = @transform_3, window_bounds = array<i64: 8, 128>}]} {
    %c0_i32 = arith.constant 0 : i32
    %0 = arith.cmpi eq, %arg1, %c0_i32 : i32
    %1 = arith.extui %0 : i1 to i32
    %c0_i32_0 = arith.constant 0 : i32
    %2 = arith.cmpi ne, %1, %c0_i32_0 : i32
    scf.if %2 {
      %cst_18 = arith.constant 0xFF800000 : f32
      %27 = vector.broadcast %cst_18 : f32 to vector<256x128xf32>
      %c0_19 = arith.constant 0 : index
      %c0_20 = arith.constant 0 : index
      %28 = vector.load %arg6[%c0_19, %c0_20] : memref<256x128xf32, #tpu.memory_space<vmem>>, vector<256x128xf32>
      tpu.vector_store %arg6[%c0_19, %c0_20], %27 {strides = array<i32>} : memref<256x128xf32, #tpu.memory_space<vmem>>, vector<256x128xf32>,
      %c0_i32_21 = arith.constant 0 : i32
      %29 = vector.broadcast %c0_i32_21 : i32 to vector<256x128xi32>
      %c0_22 = arith.constant 0 : index
      %c0_23 = arith.constant 0 : index
      %30 = vector.load %arg7[%c0_22, %c0_23] : memref<256x128xi32, #tpu.memory_space<vmem>>, vector<256x128xi32>
      tpu.vector_store %arg7[%c0_22, %c0_23], %29 {strides = array<i32>} : memref<256x128xi32, #tpu.memory_space<vmem>>, vector<256x128xi32>,
    } else {
    }
    %c0 = arith.constant 0 : index
    %c0_1 = arith.constant 0 : index
    %3 = vector.load %arg3[%c0, %c0_1] : memref<256x32xf32, #tpu.memory_space<vmem>>, vector<256x32xf32>
    %c0_2 = arith.constant 0 : index
    %c0_3 = arith.constant 0 : index
    %4 = vector.load %arg2[%c0_2, %c0_3] : memref<32x128xf32, #tpu.memory_space<vmem>>, vector<32x128xf32>
    %cst = arith.constant dense<0.000000e+00> : vector<256x128xf32>
    %5 = tpu.matmul %3, %4, %cst {dimension_numbers = #tpu.dot_dimension_numbers<[1], [0], [0], [1], [0, 0, 1, 1], [], []>} : vector<256x32xf32>, vector<32x128xf32>, vector<256x128xf32> -> vector<256x128xf32>
    %c1_i32 = arith.constant 1 : i32
    %6 = arith.muli %arg0, %c1_i32 : i32
    %7 = arith.addi %6, %arg1 : i32
    %c256_i32 = arith.constant 256 : i32
    %8 = arith.muli %7, %c256_i32 : i32
    %9 = tpu.iota {dimensions = array<i32: 0>} : vector<256x128xi32>
    %10 = vector.broadcast %8 : i32 to vector<256x128xi32>
    %11 = arith.addi %10, %9 : vector<256x128xi32>
    %c256_i32_4 = arith.constant 256 : i32
    %12 = vector.broadcast %c256_i32_4 : i32 to vector<256x128xi32>
    %13 = arith.cmpi slt, %11, %12 : vector<256x128xi32>
    %cst_5 = arith.constant 0xFF800000 : f32
    %14 = vector.broadcast %cst_5 : f32 to vector<256x128xf32>
    %15 = arith.select %13, %5, %14 : vector<256x128xi1>, vector<256x128xf32>
    %c0_6 = arith.constant 0 : index
    %c0_7 = arith.constant 0 : index
    %16 = vector.load %arg6[%c0_6, %c0_7] : memref<256x128xf32, #tpu.memory_space<vmem>>, vector<256x128xf32>
    %17 = arith.cmpf ogt, %15, %16 : vector<256x128xf32>
    %c0_8 = arith.constant 0 : index
    %c0_9 = arith.constant 0 : index
    %18 = vector.load %arg7[%c0_8, %c0_9] : memref<256x128xi32, #tpu.memory_space<vmem>>, vector<256x128xi32>
    %19 = arith.select %17, %11, %18 : vector<256x128xi1>, vector<256x128xi32>
    %c0_10 = arith.constant 0 : index
    %c0_11 = arith.constant 0 : index
    %20 = vector.load %arg7[%c0_10, %c0_11] : memref<256x128xi32, #tpu.memory_space<vmem>>, vector<256x128xi32>
    tpu.vector_store %arg7[%c0_10, %c0_11], %19 {strides = array<i32>} : memref<256x128xi32, #tpu.memory_space<vmem>>, vector<256x128xi32>,
    %c0_12 = arith.constant 0 : index
    %c0_13 = arith.constant 0 : index
    %21 = vector.load %arg6[%c0_12, %c0_13] : memref<256x128xf32, #tpu.memory_space<vmem>>, vector<256x128xf32>
    %22 = arith.select %17, %15, %21 : vector<256x128xi1>, vector<256x128xf32>
    %c0_14 = arith.constant 0 : index
    %c0_15 = arith.constant 0 : index
    %23 = vector.load %arg6[%c0_14, %c0_15] : memref<256x128xf32, #tpu.memory_space<vmem>>, vector<256x128xf32>
    tpu.vector_store %arg6[%c0_14, %c0_15], %22 {strides = array<i32>} : memref<256x128xf32, #tpu.memory_space<vmem>>, vector<256x128xf32>,
    %c0_i32_16 = arith.constant 0 : i32
    %24 = arith.cmpi eq, %arg1, %c0_i32_16 : i32
    %25 = arith.extui %24 : i1 to i32
    %c0_i32_17 = arith.constant 0 : i32
    %26 = arith.cmpi ne, %25, %c0_i32_17 : i32
    scf.if %26 {
      %c0_18 = arith.constant 0 : index
      %c0_19 = arith.constant 0 : index
      %27 = vector.load %arg6[%c0_18, %c0_19] : memref<256x128xf32, #tpu.memory_space<vmem>>, vector<256x128xf32>
      %c0_20 = arith.constant 0 : index
      %c0_21 = arith.constant 0 : index
      %28 = vector.load %arg7[%c0_20, %c0_21] : memref<256x128xi32, #tpu.memory_space<vmem>>, vector<256x128xi32>
      %29 = vector.shape_cast %27 : vector<256x128xf32> to vector<1x256x128xf32>
      %cst_22 = arith.constant dense<0xFF800000> : vector<1xf32>
      %30 = vector.multi_reduction <maximumf>, %29, %cst_22 [1, 2] : vector<1x256x128xf32> to vector<1xf32>
      %31 = vector.shape_cast %30 : vector<1xf32> to vector<1x1x1xf32>
      %32 = vector.extract %31[0, 0, 0] : f32 from vector<1x1x1xf32>
      %33 = vector.broadcast %32 : f32 to vector<256x128xf32>
      %34 = arith.cmpf oeq, %27, %33 : vector<256x128xf32>
      %c256_i32_23 = arith.constant 256 : i32
      %35 = vector.broadcast %c256_i32_23 : i32 to vector<256x128xi32>
      %36 = arith.select %34, %28, %35 : vector<256x128xi1>, vector<256x128xi32>
      %37 = vector.shape_cast %36 : vector<256x128xi32> to vector<1x256x128xi32>
      %cst_24 = arith.constant dense<2147483647> : vector<1xi32>
      %38 = vector.multi_reduction <minsi>, %37, %cst_24 [1, 2] : vector<1x256x128xi32> to vector<1xi32>
      %39 = vector.shape_cast %38 : vector<1xi32> to vector<1x1x1xi32>
      %40 = vector.extract %39[0, 0, 0] : i32 from vector<1x1x1xi32>
      %c255_i32 = arith.constant 255 : i32
      %41 = arith.minsi %40, %c255_i32 : i32
      %42 = vector.broadcast %32 : f32 to vector<8x128xf32>
      %c0_25 = arith.constant 0 : index
      %c0_26 = arith.constant 0 : index
      %43 = vector.load %arg4[%c0_25, %c0_26] : memref<8x128xf32, #tpu.memory_space<vmem>>, vector<8x128xf32>
      tpu.vector_store %arg4[%c0_25, %c0_26], %42 {strides = array<i32>} : memref<8x128xf32, #tpu.memory_space<vmem>>, vector<8x128xf32>,
      %44 = vector.broadcast %41 : i32 to vector<8x128xi32>
      %c0_27 = arith.constant 0 : index
      %c0_28 = arith.constant 0 : index
      %45 = vector.load %arg5[%c0_27, %c0_28] : memref<8x128xi32, #tpu.memory_space<vmem>>, vector<8x128xi32>
      tpu.vector_store %arg5[%c0_27, %c0_28], %44 {strides = array<i32>} : memref<8x128xi32, #tpu.memory_space<vmem>>, vector<8x128xi32>,
    } else {
    }
    return
  }
  func.func @transform_0(%arg0: i32, %arg1: i32) -> (i32, i32) {
    %c0_i32 = arith.constant 0 : i32
    %c0_i32_0 = arith.constant 0 : i32
    %c0_i32_1 = arith.constant 0 : i32
    return %c0_i32, %c0_i32_0 : i32, i32
  }
  func.func @transform_1(%arg0: i32, %arg1: i32) -> (i32, i32) {
    %c1_i32 = arith.constant 1 : i32
    %0 = arith.muli %arg0, %c1_i32 : i32
    %1 = arith.addi %0, %arg1 : i32
    %c0_i32 = arith.constant 0 : i32
    %2 = arith.minsi %1, %c0_i32 : i32
    %c0_i32_0 = arith.constant 0 : i32
    %c0_i32_1 = arith.constant 0 : i32
    return %2, %c0_i32_0 : i32, i32
  }
  func.func @transform_2(%arg0: i32, %arg1: i32) -> (i32, i32) {
    %c0_i32 = arith.constant 0 : i32
    %c0_i32_0 = arith.constant 0 : i32
    return %arg0, %c0_i32 : i32, i32
  }
  func.func @transform_3(%arg0: i32, %arg1: i32) -> (i32, i32) {
    %c0_i32 = arith.constant 0 : i32
    %c0_i32_0 = arith.constant 0 : i32
    return %arg0, %c0_i32 : i32, i32
  }
}

</mosaic_0001>

<llo_original>
// kernel: tpu_custom_call.1
$region0: #{tpu_custom_call.1}
  #allocation0 [shape = 'u32[]', space=smem, size = 0x4, offset = 0x4, fixed_abs, tag = 'smem constant byte address 0x4 - core index']
  #allocation1 [shape = 'u32[144,128]{1,0:T(1,128)}', space=vmem, size = 0x12000, scoped, tag = 'internal scratch']
  #allocation2 [shape = 'f32[256,128]{1,0:T(8,128)}', space=vmem, size = 0x20000, scoped, tag = 'scratch operand']
  #allocation3 [shape = 's32[256,128]{1,0:T(8,128)}', space=vmem, size = 0x20000, scoped, tag = 'scratch operand']
  %s0 = inlined_call_operand.vmem [shape: f32[32,128], index: 0, kind: input, shape index: {}]
  %s1 = inlined_call_operand.vmem [shape: f32[256,32], index: 1, kind: input, shape index: {}]
  %s2 = inlined_call_operand.hbm [shape: f32[8,128], index: 2, kind: output, shape index: {0}]
  %s3 = inlined_call_operand.hbm [shape: s32[8,128], index: 3, kind: output, shape index: {1}]
  %4 = xla_tuple %s2, %s3
  %s5 = sld [smem:[#allocation0]]
  $region34: #{tpu_custom_call.1} parent=0
    _
  %s7 = ssub.s32 1, %s5
  %s8 = scalar_select 0, %s7, %s5
  $region1: #{tpu_custom_call.1} parent=0
    #allocation4 [shape = 'u8[4096]{0}', space=vmem, size = 0x1000, scoped, tag = 'output window, operand 0, single buffered']
    #allocation5 [shape = 's32[1]{0}', space=sflag, size = 0x4, scoped, tag = 'scoped memory for tpu_custom_call.1']
    #allocation6 [shape = 'u8[4096]{0}', space=vmem, size = 0x1000, scoped, tag = 'output window, operand 1, single buffered']
    #allocation7 [shape = 's32[1]{0}', space=sflag, size = 0x4, scoped, tag = 'scoped memory for tpu_custom_call.1']
    %9 = vsyncpa [#allocation5], 0
    %10 = vsyncpa [#allocation7], 0
    // Predicated region
    $region2: #{tpu_custom_call.1} parent=1 // pred_check
      _
    $region3: #{tpu_custom_call.1} parent=1 // pred_check_branch
      %12 = sbr.rel (0) target = $region5
    $region4: #{tpu_custom_call.1} parent=1 // pred_region
      _
    $region5: #{tpu_custom_call.1} parent=1 // pred_fallthru
      _
    // Predicated region
    $region6: #{tpu_custom_call.1} parent=1 // pred_check
      _
    $region7: #{tpu_custom_call.1} parent=1 // pred_check_branch
      %14 = sbr.rel (0) target = $region9
    $region8: #{tpu_custom_call.1} parent=1 // pred_region
      %s15 = sadd.s32 0, 0
      %p16 = scmp.lt.s32.totalorder %s15, 0
      %s17 = scalar_select %p16, %s15, 0
      %s18 = smul.u32 32, %s17
      %p19 = scmp.lt.s32.totalorder %s18, 31
      %s20 = scalar_select %p19, %s18, 31
      %s21 = smul.addr %s20, 8
      %s22 = scalar_lea.vmem %s1, %s21
      %s23 = sadd.s32 0, 0
      %p24 = scmp.lt.s32.totalorder %s23, 0
      %s25 = scalar_select %p24, %s23, 0
      %s26 = smul.u32 32, %s25
    $region9: #{tpu_custom_call.1} parent=1 // pred_fallthru
      _
    %s27 = sadd.s32 0, 0
    %p28 = scmp.lt.s32.totalorder %s27, 0
    %s29 = scalar_select %p28, %s27, 0
    %s30 = smul.u32 32, %s29
    %p31 = scmp.lt.s32.totalorder %s30, 31
    %s32 = scalar_select %p31, %s30, 31
    %s33 = smul.addr %s32, 8
    %s34 = scalar_lea.vmem %s1, %s33
    %s35 = sadd.s32 0, 0
    %p36 = scmp.lt.s32.totalorder %s35, 0
    %s37 = scalar_select %p36, %s35, 0
    %s38 = smul.u32 32, %s37
    %p39 = scmp.lt.s32.totalorder %s38, 31
    %s40 = scalar_select %p39, %s38, 31
    %s41 = smul.addr %s40, 8
    %s42 = scalar_lea.vmem %s1, %s41
    %s43 = sadd.s32 0, 0
    %p44 = scmp.lt.s32.totalorder %s43, 0
    %s45 = scalar_select %p44, %s43, 0
    %s46 = smul.u32 32, %s45
    %p47 = scmp.eq.s32.totalorder 0, 0
    // Predicated region
    $region10: #{tpu_custom_call.1} parent=1 // pred_check
      %p48 = pneg %p47
    $region11: #{tpu_custom_call.1} parent=1 // pred_check_branch
      %50 = sbr.rel (%p48) target = $region13
    $region12: #{tpu_custom_call.1} parent=1 // pred_region
      %51 = vst [vmem:[#allocation2] sm:$0xff] -inf
      %52 = vst [vmem:[#allocation2 + $0x8] sm:$0xff] -inf
      %53 = vst [vmem:[#allocation2 + $0x10] sm:$0xff] -inf
      %54 = vst [vmem:[#allocation2 + $0x18] sm:$0xff] -inf
      %55 = vst [vmem:[#allocation2 + $0x20] sm:$0xff] -inf
      %56 = vst [vmem:[#allocation2 + $0x28] sm:$0xff] -inf
      %57 = vst [vmem:[#allocation2 + $0x30] sm:$0xff] -inf
      %58 = vst [vmem:[#allocation2 + $0x38] sm:$0xff] -inf
      %59 = vst [vmem:[#allocation2 + $0x40] sm:$0xff] -inf
      %60 = vst [vmem:[#allocation2 + $0x48] sm:$0xff] -inf
      %61 = vst [vmem:[#allocation2 + $0x50] sm:$0xff] -inf
      %62 = vst [vmem:[#allocation2 + $0x58] sm:$0xff] -inf
      %63 = vst [vmem:[#allocation2 + $0x60] sm:$0xff] -inf
      %64 = vst [vmem:[#allocation2 + $0x68] sm:$0xff] -inf
      %65 = vst [vmem:[#allocation2 + $0x70] sm:$0xff] -inf
      %66 = vst [vmem:[#allocation2 + $0x78] sm:$0xff] -inf
      %67 = vst [vmem:[#allocation2 + $0x80] sm:$0xff] -inf
      %68 = vst [vmem:[#allocation2 + $0x88] sm:$0xff] -inf
      %69 = vst [vmem:[#allocation2 + $0x90] sm:$0xff] -inf
      %70 = vst [vmem:[#allocation2 + $0x98] sm:$0xff] -inf
      %71 = vst [vmem:[#allocation2 + $0xa0] sm:$0xff] -inf
      %72 = vst [vmem:[#allocation2 + $0xa8] sm:$0xff] -inf
      %73 = vst [vmem:[#allocation2 + $0xb0] sm:$0xff] -inf
      %74 = vst [vmem:[#allocation2 + $0xb8] sm:$0xff] -inf
      %75 = vst [vmem:[#allocation2 + $0xc0] sm:$0xff] -inf
      %76 = vst [vmem:[#allocation2 + $0xc8] sm:$0xff] -inf
      %77 = vst [vmem:[#allocation2 + $0xd0] sm:$0xff] -inf
      %78 = vst [vmem:[#allocation2 + $0xd8] sm:$0xff] -inf
      %79 = vst [vmem:[#allocation2 + $0xe0] sm:$0xff] -inf
      %80 = vst [vmem:[#allocation2 + $0xe8] sm:$0xff] -inf
      %81 = vst [vmem:[#allocation2 + $0xf0] sm:$0xff] -inf
      %82 = vst [vmem:[#allocation2 + $0xf8] sm:$0xff] -inf
      %83 = vst [vmem:[#allocation3] sm:$0xff] 0
      %84 = vst [vmem:[#allocation3 + $0x8] sm:$0xff] 0
      %85 = vst [vmem:[#allocation3 + $0x10] sm:$0xff] 0
      %86 = vst [vmem:[#allocation3 + $0x18] sm:$0xff] 0
      %87 = vst [vmem:[#allocation3 + $0x20] sm:$0xff] 0
      %88 = vst [vmem:[#allocation3 + $0x28] sm:$0xff] 0
      %89 = vst [vmem:[#allocation3 + $0x30] sm:$0xff] 0
      %90 = vst [vmem:[#allocation3 + $0x38] sm:$0xff] 0
      %91 = vst [vmem:[#allocation3 + $0x40] sm:$0xff] 0
      %92 = vst [vmem:[#allocation3 + $0x48] sm:$0xff] 0
      %93 = vst [vmem:[#allocation3 + $0x50] sm:$0xff] 0
      %94 = vst [vmem:[#allocation3 + $0x58] sm:$0xff] 0
      %95 = vst [vmem:[#allocation3 + $0x60] sm:$0xff] 0
      %96 = vst [vmem:[#allocation3 + $0x68] sm:$0xff] 0
      %97 = vst [vmem:[#allocation3 + $0x70] sm:$0xff] 0
      %98 = vst [vmem:[#allocation3 + $0x78] sm:$0xff] 0
      %99 = vst [vmem:[#allocation3 + $0x80] sm:$0xff] 0
      %100 = vst [vmem:[#allocation3 + $0x88] sm:$0xff] 0
      %101 = vst [vmem:[#allocation3 + $0x90] sm:$0xff] 0
      %102 = vst [vmem:[#allocation3 + $0x98] sm:$0xff] 0
      %103 = vst [vmem:[#allocation3 + $0xa0] sm:$0xff] 0
      %104 = vst [vmem:[#allocation3 + $0xa8] sm:$0xff] 0
      %105 = vst [vmem:[#allocation3 + $0xb0] sm:$0xff] 0
      %106 = vst [vmem:[#allocation3 + $0xb8] sm:$0xff] 0
      %107 = vst [vmem:[#allocation3 + $0xc0] sm:$0xff] 0
      %108 = vst [vmem:[#allocation3 + $0xc8] sm:$0xff] 0
      %109 = vst [vmem:[#allocation3 + $0xd0] sm:$0xff] 0
      %110 = vst [vmem:[#allocation3 + $0xd8] sm:$0xff] 0
      %111 = vst [vmem:[#allocation3 + $0xe0] sm:$0xff] 0
      %112 = vst [vmem:[#allocation3 + $0xe8] sm:$0xff] 0
      %113 = vst [vmem:[#allocation3 + $0xf0] sm:$0xff] 0
      %114 = vst [vmem:[#allocation3 + $0xf8] sm:$0xff] 0
    $region13: #{tpu_custom_call.1} parent=1 // pred_fallthru
      _
    %v115 = vld [vmem:[%s42] sm:$0xff]
    %v116 = vld [vmem:[%s42 + $0x8] sm:$0xff]
    %v117 = vld [vmem:[%s42 + $0x10] sm:$0xff]
    %v118 = vld [vmem:[%s42 + $0x18] sm:$0xff]
    %v119 = vld [vmem:[%s42 + $0x20] sm:$0xff]
    %v120 = vld [vmem:[%s42 + $0x28] sm:$0xff]
    %v121 = vld [vmem:[%s42 + $0x30] sm:$0xff]
    %v122 = vld [vmem:[%s42 + $0x38] sm:$0xff]
    %v123 = vld [vmem:[%s42 + $0x40] sm:$0xff]
    %v124 = vld [vmem:[%s42 + $0x48] sm:$0xff]
    %v125 = vld [vmem:[%s42 + $0x50] sm:$0xff]
    %v126 = vld [vmem:[%s42 + $0x58] sm:$0xff]
    %v127 = vld [vmem:[%s42 + $0x60] sm:$0xff]
    %v128 = vld [vmem:[%s42 + $0x68] sm:$0xff]
    %v129 = vld [vmem:[%s42 + $0x70] sm:$0xff]
    %v130 = vld [vmem:[%s42 + $0x78] sm:$0xff]
    %v131 = vld [vmem:[%s42 + $0x80] sm:$0xff]
    %v132 = vld [vmem:[%s42 + $0x88] sm:$0xff]
    %v133 = vld [vmem:[%s42 + $0x90] sm:$0xff]
    %v134 = vld [vmem:[%s42 + $0x98] sm:$0xff]
    %v135 = vld [vmem:[%s42 + $0xa0] sm:$0xff]
    %v136 = vld [vmem:[%s42 + $0xa8] sm:$0xff]
    %v137 = vld [vmem:[%s42 + $0xb0] sm:$0xff]
    %v138 = vld [vmem:[%s42 + $0xb8] sm:$0xff]
    %v139 = vld [vmem:[%s42 + $0xc0] sm:$0xff]
    %v140 = vld [vmem:[%s42 + $0xc8] sm:$0xff]
    %v141 = vld [vmem:[%s42 + $0xd0] sm:$0xff]
    %v142 = vld [vmem:[%s42 + $0xd8] sm:$0xff]
    %v143 = vld [vmem:[%s42 + $0xe0] sm:$0xff]
    %v144 = vld [vmem:[%s42 + $0xe8] sm:$0xff]
    %v145 = vld [vmem:[%s42 + $0xf0] sm:$0xff]
    %v146 = vld [vmem:[%s42 + $0xf8] sm:$0xff]
    %v147 = vld [vmem:[%s0] sm:$0xff]
    %v148 = vld [vmem:[%s0 + $0x8] sm:$0xff]
    %v149 = vld [vmem:[%s0 + $0x10] sm:$0xff]
    %v150 = vld [vmem:[%s0 + $0x18] sm:$0xff]
    %vm151 = vcmask 261120
    %v153 = vsel %vm151, %v115, 0
    %v156 = vsel %vm151, %v116, 0
    %v159 = vsel %vm151, %v117, 0
    %v162 = vsel %vm151, %v118, 0
    %v165 = vsel %vm151, %v119, 0
    %v168 = vsel %vm151, %v120, 0
    %v171 = vsel %vm151, %v121, 0
    %v174 = vsel %vm151, %v122, 0
    %v177 = vsel %vm151, %v123, 0
    %v180 = vsel %vm151, %v124, 0
    %v183 = vsel %vm151, %v125, 0
    %v186 = vsel %vm151, %v126, 0
    %v189 = vsel %vm151, %v127, 0
    %v192 = vsel %vm151, %v128, 0
    %v195 = vsel %vm151, %v129, 0
    %v198 = vsel %vm151, %v130, 0
    %v201 = vsel %vm151, %v131, 0
    %v204 = vsel %vm151, %v132, 0
    %v207 = vsel %vm151, %v133, 0
    %v210 = vsel %vm151, %v134, 0
    %v213 = vsel %vm151, %v135, 0
    %v216 = vsel %vm151, %v136, 0
    %v219 = vsel %vm151, %v137, 0
    %v222 = vsel %vm151, %v138, 0
    %v225 = vsel %vm151, %v139, 0
    %v228 = vsel %vm151, %v140, 0
    %v231 = vsel %vm151, %v141, 0
    %v234 = vsel %vm151, %v142, 0
    %v237 = vsel %vm151, %v143, 0
    %v240 = vsel %vm151, %v144, 0
    %v243 = vsel %vm151, %v145, 0
    %v246 = vsel %vm151, %v146, 0
    %248 = vmatprep.subr.mxu0 0.0
    %249 = vmatpush1.msra.mxu0 %v147
    %250 = vmatprep.subr.mxu0 0.0
    %251 = vmatpush1.msra.mxu0 %v148
    %252 = vmatprep.subr.mxu0 0.0
    %253 = vmatpush1.msra.mxu0 %v149
    %254 = vmatprep.subr.mxu0 0.0
    %255 = vmatpush1.msra.mxu0 %v150
    %256 = vmatprep.subr.mxu0 0.0
    %257 = vmatpush1.msra.mxu0 0.0
    %258 = vmatprep.subr.mxu0 0.0
    %259 = vmatpush1.msra.mxu0 0.0
    %260 = vmatprep.subr.mxu0 0.0
    %261 = vmatpush1.msra.mxu0 0.0
    %262 = vmatprep.subr.mxu0 0.0
    %263 = vmatpush1.msra.mxu0 0.0
    %264 = vmatprep.subr.mxu0 0.0
    %265 = vmatpush1.msra.mxu0 0.0
    %266 = vmatprep.subr.mxu0 0.0
    %267 = vmatpush1.msra.mxu0 0.0
    %268 = vmatprep.subr.mxu0 0.0
    %269 = vmatpush1.msra.mxu0 0.0
    %270 = vmatprep.subr.mxu0 0.0
    %271 = vmatpush1.msra.mxu0 0.0
    %272 = vmatprep.subr.mxu0 0.0
    %273 = vmatpush1.msra.mxu0 0.0
    %274 = vmatprep.subr.mxu0 0.0
    %275 = vmatpush1.msra.mxu0 0.0
    %276 = vmatprep.subr.mxu0 0.0
    %277 = vmatpush1.msra.mxu0 0.0
    %278 = vmatprep.subr.mxu0 0.0
    %279 = vmatpush1.msra.mxu0 0.0
    %280 = vmatprep.subr.mxu0 0.0
    %281 = vmatpush1.msra.mxu0 0.0
    %282 = vmatprep.subr.mxu0 0.0
    %283 = vmatpush1.msra.mxu0 0.0
    %284 = vmatprep.subr.mxu0 0.0
    %285 = vmatpush1.msra.mxu0 0.0
    %286 = vmatprep.subr.mxu0 0.0
    %287 = vmatpush1.msra.mxu0 0.0
    %288 = vmatprep.subr.mxu0 0.0
    %289 = vmatpush1.msra.mxu0 0.0
    %290 = vmatprep.subr.mxu0 0.0
    %291 = vmatpush1.msra.mxu0 0.0
    %292 = vmatprep.subr.mxu0 0.0
    %293 = vmatpush1.msra.mxu0 0.0
    %294 = vmatprep.subr.mxu0 0.0
    %295 = vmatpush1.msra.mxu0 0.0
    %296 = vmatprep.subr.mxu0 0.0
    %297 = vmatpush1.msra.mxu0 0.0
    %298 = vmatprep.subr.mxu0 0.0
    %299 = vmatpush1.msra.mxu0 0.0
    %300 = vmatprep.subr.mxu0 0.0
    %301 = vmatpush1.msra.mxu0 0.0
    %302 = vmatprep.subr.mxu0 0.0
    %303 = vmatpush1.msra.mxu0 0.0
    %304 = vmatprep.subr.mxu0 0.0
    %305 = vmatpush1.msra.mxu0 0.0
    %306 = vmatprep.subr.mxu0 0.0
    %307 = vmatpush1.msra.mxu0 0.0
    %308 = vmatprep.subr.mxu0 0.0
    %309 = vmatpush1.msra.mxu0 0.0
    %310 = vmatprep.subr.mxu0 0.0
    %311 = vmatpush1.msra.mxu0 0.0
    %312 = vmatprep.mubr.f32.mxu0 0.0
    %313 = vmatmul.mubr.f32.gmra.mrb[0].mxu0 %v153
    %v314 = vpop.f32.mrb[0].mxu0
    %v315 = vadd.f32 0.0, %v314
    %v316 = vpop.f32.mrb[0].mxu0
    %317 = vmatprep.mubr.f32.mxu0 0.0
    %318 = vmatmul.mubr.f32.gmra.mrb[0].mxu0 %v156
    %v319 = vpop.f32.mrb[0].mxu0
    %v320 = vadd.f32 0.0, %v319
    %v321 = vpop.f32.mrb[0].mxu0
    %322 = vmatprep.mubr.f32.mxu0 0.0
    %323 = vmatmul.mubr.f32.gmra.mrb[0].mxu0 %v159
    %v324 = vpop.f32.mrb[0].mxu0
    %v325 = vadd.f32 0.0, %v324
    %v326 = vpop.f32.mrb[0].mxu0
    %327 = vmatprep.mubr.f32.mxu0 0.0
    %328 = vmatmul.mubr.f32.gmra.mrb[0].mxu0 %v162
    %v329 = vpop.f32.mrb[0].mxu0
    %v330 = vadd.f32 0.0, %v329
    %v331 = vpop.f32.mrb[0].mxu0
    %332 = vmatprep.mubr.f32.mxu0 0.0
    %333 = vmatmul.mubr.f32.gmra.mrb[0].mxu0 %v165
    %v334 = vpop.f32.mrb[0].mxu0
    %v335 = vadd.f32 0.0, %v334
    %v336 = vpop.f32.mrb[0].mxu0
    %337 = vmatprep.mubr.f32.mxu0 0.0
    %338 = vmatmul.mubr.f32.gmra.mrb[0].mxu0 %v168
    %v339 = vpop.f32.mrb[0].mxu0
    %v340 = vadd.f32 0.0, %v339
    %v341 = vpop.f32.mrb[0].mxu0
    %342 = vmatprep.mubr.f32.mxu0 0.0
    %343 = vmatmul.mubr.f32.gmra.mrb[0].mxu0 %v171
    %v344 = vpop.f32.mrb[0].mxu0
    %v345 = vadd.f32 0.0, %v344
    %v346 = vpop.f32.mrb[0].mxu0
    %347 = vmatprep.mubr.f32.mxu0 0.0
    %348 = vmatmul.mubr.f32.gmra.mrb[0].mxu0 %v174
    %v349 = vpop.f32.mrb[0].mxu0
    %v350 = vadd.f32 0.0, %v349
    %v351 = vpop.f32.mrb[0].mxu0
    %352 = vmatprep.mubr.f32.mxu0 0.0
    %353 = vmatmul.mubr.f32.gmra.mrb[0].mxu0 %v177
    %v354 = vpop.f32.mrb[0].mxu0
    %v355 = vadd.f32 0.0, %v354
    %v356 = vpop.f32.mrb[0].mxu0
    %357 = vmatprep.mubr.f32.mxu0 0.0
    %358 = vmatmul.mubr.f32.gmra.mrb[0].mxu0 %v180
    %v359 = vpop.f32.mrb[0].mxu0
    %v360 = vadd.f32 0.0, %v359
    %v361 = vpop.f32.mrb[0].mxu0
    %362 = vmatprep.mubr.f32.mxu0 0.0
    %363 = vmatmul.mubr.f32.gmra.mrb[0].mxu0 %v183
    %v364 = vpop.f32.mrb[0].mxu0
    %v365 = vadd.f32 0.0, %v364
    %v366 = vpop.f32.mrb[0].mxu0
    %367 = vmatprep.mubr.f32.mxu0 0.0
    %368 = vmatmul.mubr.f32.gmra.mrb[0].mxu0 %v186
    %v369 = vpop.f32.mrb[0].mxu0
    %v370 = vadd.f32 0.0, %v369
    %v371 = vpop.f32.mrb[0].mxu0
    %372 = vmatprep.mubr.f32.mxu0 0.0
    %373 = vmatmul.mubr.f32.gmra.mrb[0].mxu0 %v189
    %v374 = vpop.f32.mrb[0].mxu0
    %v375 = vadd.f32 0.0, %v374
    %v376 = vpop.f32.mrb[0].mxu0
    %377 = vmatprep.mubr.f32.mxu0 0.0
    %378 = vmatmul.mubr.f32.gmra.mrb[0].mxu0 %v192
    %v379 = vpop.f32.mrb[0].mxu0
    %v380 = vadd.f32 0.0, %v379
    %v381 = vpop.f32.mrb[0].mxu0
    %382 = vmatprep.mubr.f32.mxu0 0.0
    %383 = vmatmul.mubr.f32.gmra.mrb[0].mxu0 %v195
    %v384 = vpop.f32.mrb[0].mxu0
    %v385 = vadd.f32 0.0, %v384
    %v386 = vpop.f32.mrb[0].mxu0
    %387 = vmatprep.mubr.f32.mxu0 0.0
    %388 = vmatmul.mubr.f32.gmra.mrb[0].mxu0 %v198
    %v389 = vpop.f32.mrb[0].mxu0
    %v390 = vadd.f32 0.0, %v389
    %v391 = vpop.f32.mrb[0].mxu0
    %392 = vmatprep.mubr.f32.mxu0 0.0
    %393 = vmatmul.mubr.f32.gmra.mrb[0].mxu0 %v201
    %v394 = vpop.f32.mrb[0].mxu0
    %v395 = vadd.f32 0.0, %v394
    %v396 = vpop.f32.mrb[0].mxu0
    %397 = vmatprep.mubr.f32.mxu0 0.0
    %398 = vmatmul.mubr.f32.gmra.mrb[0].mxu0 %v204
    %v399 = vpop.f32.mrb[0].mxu0
    %v400 = vadd.f32 0.0, %v399
    %v401 = vpop.f32.mrb[0].mxu0
    %402 = vmatprep.mubr.f32.mxu0 0.0
    %403 = vmatmul.mubr.f32.gmra.mrb[0].mxu0 %v207
    %v404 = vpop.f32.mrb[0].mxu0
    %v405 = vadd.f32 0.0, %v404
    %v406 = vpop.f32.mrb[0].mxu0
    %407 = vmatprep.mubr.f32.mxu0 0.0
    %408 = vmatmul.mubr.f32.gmra.mrb[0].mxu0 %v210
    %v409 = vpop.f32.mrb[0].mxu0
    %v410 = vadd.f32 0.0, %v409
    %v411 = vpop.f32.mrb[0].mxu0
    %412 = vmatprep.mubr.f32.mxu0 0.0
    %413 = vmatmul.mubr.f32.gmra.mrb[0].mxu0 %v213
    %v414 = vpop.f32.mrb[0].mxu0
    %v415 = vadd.f32 0.0, %v414
    %v416 = vpop.f32.mrb[0].mxu0
    %417 = vmatprep.mubr.f32.mxu0 0.0
    %418 = vmatmul.mubr.f32.gmra.mrb[0].mxu0 %v216
    %v419 = vpop.f32.mrb[0].mxu0
    %v420 = vadd.f32 0.0, %v419
    %v421 = vpop.f32.mrb[0].mxu0
    %422 = vmatprep.mubr.f32.mxu0 0.0
    %423 = vmatmul.mubr.f32.gmra.mrb[0].mxu0 %v219
    %v424 = vpop.f32.mrb[0].mxu0
    %v425 = vadd.f32 0.0, %v424
    %v426 = vpop.f32.mrb[0].mxu0
    %427 = vmatprep.mubr.f32.mxu0 0.0
    %428 = vmatmul.mubr.f32.gmra.mrb[0].mxu0 %v222
    %v429 = vpop.f32.mrb[0].mxu0
    %v430 = vadd.f32 0.0, %v429
    %v431 = vpop.f32.mrb[0].mxu0
    %432 = vmatprep.mubr.f32.mxu0 0.0
    %433 = vmatmul.mubr.f32.gmra.mrb[0].mxu0 %v225
    %v434 = vpop.f32.mrb[0].mxu0
    %v435 = vadd.f32 0.0, %v434
    %v436 = vpop.f32.mrb[0].mxu0
    %437 = vmatprep.mubr.f32.mxu0 0.0
    %438 = vmatmul.mubr.f32.gmra.mrb[0].mxu0 %v228
    %v439 = vpop.f32.mrb[0].mxu0
    %v440 = vadd.f32 0.0, %v439
    %v441 = vpop.f32.mrb[0].mxu0
    %442 = vmatprep.mubr.f32.mxu0 0.0
    %443 = vmatmul.mubr.f32.gmra.mrb[0].mxu0 %v231
    %v444 = vpop.f32.mrb[0].mxu0
    %v445 = vadd.f32 0.0, %v444
    %v446 = vpop.f32.mrb[0].mxu0
    %447 = vmatprep.mubr.f32.mxu0 0.0
    %448 = vmatmul.mubr.f32.gmra.mrb[0].mxu0 %v234
    %v449 = vpop.f32.mrb[0].mxu0
    %v450 = vadd.f32 0.0, %v449
    %v451 = vpop.f32.mrb[0].mxu0
    %452 = vmatprep.mubr.f32.mxu0 0.0
    %453 = vmatmul.mubr.f32.gmra.mrb[0].mxu0 %v237
    %v454 = vpop.f32.mrb[0].mxu0
    %v455 = vadd.f32 0.0, %v454
    %v456 = vpop.f32.mrb[0].mxu0
    %457 = vmatprep.mubr.f32.mxu0 0.0
    %458 = vmatmul.mubr.f32.gmra.mrb[0].mxu0 %v240
    %v459 = vpop.f32.mrb[0].mxu0
    %v460 = vadd.f32 0.0, %v459
    %v461 = vpop.f32.mrb[0].mxu0
    %462 = vmatprep.mubr.f32.mxu0 0.0
    %463 = vmatmul.mubr.f32.gmra.mrb[0].mxu0 %v243
    %v464 = vpop.f32.mrb[0].mxu0
    %v465 = vadd.f32 0.0, %v464
    %v466 = vpop.f32.mrb[0].mxu0
    %467 = vmatprep.mubr.f32.mxu0 0.0
    %468 = vmatmul.mubr.f32.gmra.mrb[0].mxu0 %v246
    %v469 = vpop.f32.mrb[0].mxu0
    %v470 = vadd.f32 0.0, %v469
    %v471 = vpop.f32.mrb[0].mxu0
    %472 = vdwg.mxu0
    %s473 = sadd.s32 0, 0
    %s474 = smul.u32 %s473, 256
    %v475 = vlaneseq
    %v476 = vshrl.u32 %v475, 7
    %v477 = vadd.s32 %v476, 8
    %v478 = vadd.s32 %v476, 16
    %v479 = vadd.s32 %v476, 24
    %v480 = vadd.s32 %v476, 32
    %v481 = vadd.s32 %v476, 40
    %v482 = vadd.s32 %v476, 48
    %v483 = vadd.s32 %v476, 56
    %v484 = vadd.s32 %v476, 64
    %v485 = vadd.s32 %v476, 72
    %v486 = vadd.s32 %v476, 80
    %v487 = vadd.s32 %v476, 88
    %v488 = vadd.s32 %v476, 96
    %v489 = vadd.s32 %v476, 104
    %v490 = vadd.s32 %v476, 112
    %v491 = vadd.s32 %v476, 120
    %v492 = vadd.s32 %v476, 128
    %v493 = vadd.s32 %v476, 136
    %v494 = vadd.s32 %v476, 144
    %v495 = vadd.s32 %v476, 152
    %v496 = vadd.s32 %v476, 160
    %v497 = vadd.s32 %v476, 168
    %v498 = vadd.s32 %v476, 176
    %v499 = vadd.s32 %v476, 184
    %v500 = vadd.s32 %v476, 192
    %v501 = vadd.s32 %v476, 200
    %v502 = vadd.s32 %v476, 208
    %v503 = vadd.s32 %v476, 216
    %v504 = vadd.s32 %v476, 224
    %v505 = vadd.s32 %v476, 232
    %v506 = vadd.s32 %v476, 240
    %v507 = vadd.s32 %v476, 248
    %v508 = vstv %s474
    %v509 = vadd.s32 %v508, %v476
    %v510 = vadd.s32 %v508, %v477
    %v511 = vadd.s32 %v508, %v478
    %v512 = vadd.s32 %v508, %v479
    %v513 = vadd.s32 %v508, %v480
    %v514 = vadd.s32 %v508, %v481
    %v515 = vadd.s32 %v508, %v482
    %v516 = vadd.s32 %v508, %v483
    %v517 = vadd.s32 %v508, %v484
    %v518 = vadd.s32 %v508, %v485
    %v519 = vadd.s32 %v508, %v486
    %v520 = vadd.s32 %v508, %v487
    %v521 = vadd.s32 %v508, %v488
    %v522 = vadd.s32 %v508, %v489
    %v523 = vadd.s32 %v508, %v490
    %v524 = vadd.s32 %v508, %v491
    %v525 = vadd.s32 %v508, %v492
    %v526 = vadd.s32 %v508, %v493
    %v527 = vadd.s32 %v508, %v494
    %v528 = vadd.s32 %v508, %v495
    %v529 = vadd.s32 %v508, %v496
    %v530 = vadd.s32 %v508, %v497
    %v531 = vadd.s32 %v508, %v498
    %v532 = vadd.s32 %v508, %v499
    %v533 = vadd.s32 %v508, %v500
    %v534 = vadd.s32 %v508, %v501
    %v535 = vadd.s32 %v508, %v502
    %v536 = vadd.s32 %v508, %v503
    %v537 = vadd.s32 %v508, %v504
    %v538 = vadd.s32 %v508, %v505
    %v539 = vadd.s32 %v508, %v506
    %v540 = vadd.s32 %v508, %v507
    %vm541 = vcmp.lt.s32.totalorder %v509, 256
    %vm542 = vcmp.lt.s32.totalorder %v510, 256
    %vm543 = vcmp.lt.s32.totalorder %v511, 256
    %vm544 = vcmp.lt.s32.totalorder %v512, 256
    %vm545 = vcmp.lt.s32.totalorder %v513, 256
    %vm546 = vcmp.lt.s32.totalorder %v514, 256
    %vm547 = vcmp.lt.s32.totalorder %v515, 256
    %vm548 = vcmp.lt.s32.totalorder %v516, 256
    %vm549 = vcmp.lt.s32.totalorder %v517, 256
    %vm550 = vcmp.lt.s32.totalorder %v518, 256
    %vm551 = vcmp.lt.s32.totalorder %v519, 256
    %vm552 = vcmp.lt.s32.totalorder %v520, 256
    %vm553 = vcmp.lt.s32.totalorder %v521, 256
    %vm554 = vcmp.lt.s32.totalorder %v522, 256
    %vm555 = vcmp.lt.s32.totalorder %v523, 256
    %vm556 = vcmp.lt.s32.totalorder %v524, 256
    %vm557 = vcmp.lt.s32.totalorder %v525, 256
    %vm558 = vcmp.lt.s32.totalorder %v526, 256
    %vm559 = vcmp.lt.s32.totalorder %v527, 256
    %vm560 = vcmp.lt.s32.totalorder %v528, 256
    %vm561 = vcmp.lt.s32.totalorder %v529, 256
    %vm562 = vcmp.lt.s32.totalorder %v530, 256
    %vm563 = vcmp.lt.s32.totalorder %v531, 256
    %vm564 = vcmp.lt.s32.totalorder %v532, 256
    %vm565 = vcmp.lt.s32.totalorder %v533, 256
    %vm566 = vcmp.lt.s32.totalorder %v534, 256
    %vm567 = vcmp.lt.s32.totalorder %v535, 256
    %vm568 = vcmp.lt.s32.totalorder %v536, 256
    %vm569 = vcmp.lt.s32.totalorder %v537, 256
    %vm570 = vcmp.lt.s32.totalorder %v538, 256
    %vm571 = vcmp.lt.s32.totalorder %v539, 256
    %vm572 = vcmp.lt.s32.totalorder %v540, 256
    %v573 = vsel %vm541, %v315, -inf
    %v574 = vsel %vm542, %v320, -inf
    %v575 = vsel %vm543, %v325, -inf
    %v576 = vsel %vm544, %v330, -inf
    %v577 = vsel %vm545, %v335, -inf
    %v578 = vsel %vm546, %v340, -inf
    %v579 = vsel %vm547, %v345, -inf
    %v580 = vsel %vm548, %v350, -inf
    %v581 = vsel %vm549, %v355, -inf
    %v582 = vsel %vm550, %v360, -inf
    %v583 = vsel %vm551, %v365, -inf
    %v584 = vsel %vm552, %v370, -inf
    %v585 = vsel %vm553, %v375, -inf
    %v586 = vsel %vm554, %v380, -inf
    %v587 = vsel %vm555, %v385, -inf
    %v588 = vsel %vm556, %v390, -inf
    %v589 = vsel %vm557, %v395, -inf
    %v590 = vsel %vm558, %v400, -inf
    %v591 = vsel %vm559, %v405, -inf
    %v592 = vsel %vm560, %v410, -inf
    %v593 = vsel %vm561, %v415, -inf
    %v594 = vsel %vm562, %v420, -inf
    %v595 = vsel %vm563, %v425, -inf
    %v596 = vsel %vm564, %v430, -inf
    %v597 = vsel %vm565, %v435, -inf
    %v598 = vsel %vm566, %v440, -inf
    %v599 = vsel %vm567, %v445, -inf
    %v600 = vsel %vm568, %v450, -inf
    %v601 = vsel %vm569, %v455, -inf
    %v602 = vsel %vm570, %v460, -inf
    %v603 = vsel %vm571, %v465, -inf
    %v604 = vsel %vm572, %v470, -inf
    %v605 = vld [vmem:[#allocation2] sm:$0xff]
    %v606 = vld [vmem:[#allocation2 + $0x8] sm:$0xff]
    %v607 = vld [vmem:[#allocation2 + $0x10] sm:$0xff]
    %v608 = vld [vmem:[#allocation2 + $0x18] sm:$0xff]
    %v609 = vld [vmem:[#allocation2 + $0x20] sm:$0xff]
    %v610 = vld [vmem:[#allocation2 + $0x28] sm:$0xff]
    %v611 = vld [vmem:[#allocation2 + $0x30] sm:$0xff]
    %v612 = vld [vmem:[#allocation2 + $0x38] sm:$0xff]
    %v613 = vld [vmem:[#allocation2 + $0x40] sm:$0xff]
    %v614 = vld [vmem:[#allocation2 + $0x48] sm:$0xff]
    %v615 = vld [vmem:[#allocation2 + $0x50] sm:$0xff]
    %v616 = vld [vmem:[#allocation2 + $0x58] sm:$0xff]
    %v617 = vld [vmem:[#allocation2 + $0x60] sm:$0xff]
    %v618 = vld [vmem:[#allocation2 + $0x68] sm:$0xff]
    %v619 = vld [vmem:[#allocation2 + $0x70] sm:$0xff]
    %v620 = vld [vmem:[#allocation2 + $0x78] sm:$0xff]
    %v621 = vld [vmem:[#allocation2 + $0x80] sm:$0xff]
    %v622 = vld [vmem:[#allocation2 + $0x88] sm:$0xff]
    %v623 = vld [vmem:[#allocation2 + $0x90] sm:$0xff]
    %v624 = vld [vmem:[#allocation2 + $0x98] sm:$0xff]
    %v625 = vld [vmem:[#allocation2 + $0xa0] sm:$0xff]
    %v626 = vld [vmem:[#allocation2 + $0xa8] sm:$0xff]
    %v627 = vld [vmem:[#allocation2 + $0xb0] sm:$0xff]
    %v628 = vld [vmem:[#allocation2 + $0xb8] sm:$0xff]
    %v629 = vld [vmem:[#allocation2 + $0xc0] sm:$0xff]
    %v630 = vld [vmem:[#allocation2 + $0xc8] sm:$0xff]
    %v631 = vld [vmem:[#allocation2 + $0xd0] sm:$0xff]
    %v632 = vld [vmem:[#allocation2 + $0xd8] sm:$0xff]
    %v633 = vld [vmem:[#allocation2 + $0xe0] sm:$0xff]
    %v634 = vld [vmem:[#allocation2 + $0xe8] sm:$0xff]
    %v635 = vld [vmem:[#allocation2 + $0xf0] sm:$0xff]
    %v636 = vld [vmem:[#allocation2 + $0xf8] sm:$0xff]
    %vm637 = vcmp.gt.f32.partialorder %v573, %v605
    %vm638 = vcmp.gt.f32.partialorder %v574, %v606
    %vm639 = vcmp.gt.f32.partialorder %v575, %v607
    %vm640 = vcmp.gt.f32.partialorder %v576, %v608
    %vm641 = vcmp.gt.f32.partialorder %v577, %v609
    %vm642 = vcmp.gt.f32.partialorder %v578, %v610
    %vm643 = vcmp.gt.f32.partialorder %v579, %v611
    %vm644 = vcmp.gt.f32.partialorder %v580, %v612
    %vm645 = vcmp.gt.f32.partialorder %v581, %v613
    %vm646 = vcmp.gt.f32.partialorder %v582, %v614
    %vm647 = vcmp.gt.f32.partialorder %v583, %v615
    %vm648 = vcmp.gt.f32.partialorder %v584, %v616
    %vm649 = vcmp.gt.f32.partialorder %v585, %v617
    %vm650 = vcmp.gt.f32.partialorder %v586, %v618
    %vm651 = vcmp.gt.f32.partialorder %v587, %v619
    %vm652 = vcmp.gt.f32.partialorder %v588, %v620
    %vm653 = vcmp.gt.f32.partialorder %v589, %v621
    %vm654 = vcmp.gt.f32.partialorder %v590, %v622
    %vm655 = vcmp.gt.f32.partialorder %v591, %v623
    %vm656 = vcmp.gt.f32.partialorder %v592, %v624
    %vm657 = vcmp.gt.f32.partialorder %v593, %v625
    %vm658 = vcmp.gt.f32.partialorder %v594, %v626
    %vm659 = vcmp.gt.f32.partialorder %v595, %v627
    %vm660 = vcmp.gt.f32.partialorder %v596, %v628
    %vm661 = vcmp.gt.f32.partialorder %v597, %v629
    %vm662 = vcmp.gt.f32.partialorder %v598, %v630
    %vm663 = vcmp.gt.f32.partialorder %v599, %v631
    %vm664 = vcmp.gt.f32.partialorder %v600, %v632
    %vm665 = vcmp.gt.f32.partialorder %v601, %v633
    %vm666 = vcmp.gt.f32.partialorder %v602, %v634
    %vm667 = vcmp.gt.f32.partialorder %v603, %v635
    %vm668 = vcmp.gt.f32.partialorder %v604, %v636
    %v669 = vld [vmem:[#allocation3] sm:$0xff]
    %v670 = vld [vmem:[#allocation3 + $0x8] sm:$0xff]
    %v671 = vld [vmem:[#allocation3 + $0x10] sm:$0xff]
    %v672 = vld [vmem:[#allocation3 + $0x18] sm:$0xff]
    %v673 = vld [vmem:[#allocation3 + $0x20] sm:$0xff]
    %v674 = vld [vmem:[#allocation3 + $0x28] sm:$0xff]
    %v675 = vld [vmem:[#allocation3 + $0x30] sm:$0xff]
    %v676 = vld [vmem:[#allocation3 + $0x38] sm:$0xff]
    %v677 = vld [vmem:[#allocation3 + $0x40] sm:$0xff]
    %v678 = vld [vmem:[#allocation3 + $0x48] sm:$0xff]
    %v679 = vld [vmem:[#allocation3 + $0x50] sm:$0xff]
    %v680 = vld [vmem:[#allocation3 + $0x58] sm:$0xff]
    %v681 = vld [vmem:[#allocation3 + $0x60] sm:$0xff]
    %v682 = vld [vmem:[#allocation3 + $0x68] sm:$0xff]
    %v683 = vld [vmem:[#allocation3 + $0x70] sm:$0xff]
    %v684 = vld [vmem:[#allocation3 + $0x78] sm:$0xff]
    %v685 = vld [vmem:[#allocation3 + $0x80] sm:$0xff]
    %v686 = vld [vmem:[#allocation3 + $0x88] sm:$0xff]
    %v687 = vld [vmem:[#allocation3 + $0x90] sm:$0xff]
    %v688 = vld [vmem:[#allocation3 + $0x98] sm:$0xff]
    %v689 = vld [vmem:[#allocation3 + $0xa0] sm:$0xff]
    %v690 = vld [vmem:[#allocation3 + $0xa8] sm:$0xff]
    %v691 = vld [vmem:[#allocation3 + $0xb0] sm:$0xff]
    %v692 = vld [vmem:[#allocation3 + $0xb8] sm:$0xff]
    %v693 = vld [vmem:[#allocation3 + $0xc0] sm:$0xff]
    %v694 = vld [vmem:[#allocation3 + $0xc8] sm:$0xff]
    %v695 = vld [vmem:[#allocation3 + $0xd0] sm:$0xff]
    %v696 = vld [vmem:[#allocation3 + $0xd8] sm:$0xff]
    %v697 = vld [vmem:[#allocation3 + $0xe0] sm:$0xff]
    %v698 = vld [vmem:[#allocation3 + $0xe8] sm:$0xff]
    %v699 = vld [vmem:[#allocation3 + $0xf0] sm:$0xff]
    %v700 = vld [vmem:[#allocation3 + $0xf8] sm:$0xff]
    %v701 = vsel %vm637, %v509, %v669
    %v702 = vsel %vm638, %v510, %v670
    %v703 = vsel %vm639, %v511, %v671
    %v704 = vsel %vm640, %v512, %v672
    %v705 = vsel %vm641, %v513, %v673
    %v706 = vsel %vm642, %v514, %v674
    %v707 = vsel %vm643, %v515, %v675
    %v708 = vsel %vm644, %v516, %v676
    %v709 = vsel %vm645, %v517, %v677
    %v710 = vsel %vm646, %v518, %v678
    %v711 = vsel %vm647, %v519, %v679
    %v712 = vsel %vm648, %v520, %v680
    %v713 = vsel %vm649, %v521, %v681
    %v714 = vsel %vm650, %v522, %v682
    %v715 = vsel %vm651, %v523, %v683
    %v716 = vsel %vm652, %v524, %v684
    %v717 = vsel %vm653, %v525, %v685
    %v718 = vsel %vm654, %v526, %v686
    %v719 = vsel %vm655, %v527, %v687
    %v720 = vsel %vm656, %v528, %v688
    %v721 = vsel %vm657, %v529, %v689
    %v722 = vsel %vm658, %v530, %v690
    %v723 = vsel %vm659, %v531, %v691
    %v724 = vsel %vm660, %v532, %v692
    %v725 = vsel %vm661, %v533, %v693
    %v726 = vsel %vm662, %v534, %v694
    %v727 = vsel %vm663, %v535, %v695
    %v728 = vsel %vm664, %v536, %v696
    %v729 = vsel %vm665, %v537, %v697
    %v730 = vsel %vm666, %v538, %v698
    %v731 = vsel %vm667, %v539, %v699
    %v732 = vsel %vm668, %v540, %v700
    %733 = vst [vmem:[#allocation3] sm:$0xff] %v701
    %734 = vst [vmem:[#allocation3 + $0x8] sm:$0xff] %v702
    %735 = vst [vmem:[#allocation3 + $0x10] sm:$0xff] %v703
    %736 = vst [vmem:[#allocation3 + $0x18] sm:$0xff] %v704
    %737 = vst [vmem:[#allocation3 + $0x20] sm:$0xff] %v705
    %738 = vst [vmem:[#allocation3 + $0x28] sm:$0xff] %v706
    %739 = vst [vmem:[#allocation3 + $0x30] sm:$0xff] %v707
    %740 = vst [vmem:[#allocation3 + $0x38] sm:$0xff] %v708
    %741 = vst [vmem:[#allocation3 + $0x40] sm:$0xff] %v709
    %742 = vst [vmem:[#allocation3 + $0x48] sm:$0xff] %v710
    %743 = vst [vmem:[#allocation3 + $0x50] sm:$0xff] %v711
    %744 = vst [vmem:[#allocation3 + $0x58] sm:$0xff] %v712
    %745 = vst [vmem:[#allocation3 + $0x60] sm:$0xff] %v713
    %746 = vst [vmem:[#allocation3 + $0x68] sm:$0xff] %v714
    %747 = vst [vmem:[#allocation3 + $0x70] sm:$0xff] %v715
    %748 = vst [vmem:[#allocation3 + $0x78] sm:$0xff] %v716
    %749 = vst [vmem:[#allocation3 + $0x80] sm:$0xff] %v717
    %750 = vst [vmem:[#allocation3 + $0x88] sm:$0xff] %v718
    %751 = vst [vmem:[#allocation3 + $0x90] sm:$0xff] %v719
    %752 = vst [vmem:[#allocation3 + $0x98] sm:$0xff] %v720
    %753 = vst [vmem:[#allocation3 + $0xa0] sm:$0xff] %v721
    %754 = vst [vmem:[#allocation3 + $0xa8] sm:$0xff] %v722
    %755 = vst [vmem:[#allocation3 + $0xb0] sm:$0xff] %v723
    %756 = vst [vmem:[#allocation3 + $0xb8] sm:$0xff] %v724
    %757 = vst [vmem:[#allocation3 + $0xc0] sm:$0xff] %v725
    %758 = vst [vmem:[#allocation3 + $0xc8] sm:$0xff] %v726
    %759 = vst [vmem:[#allocation3 + $0xd0] sm:$0xff] %v727
    %760 = vst [vmem:[#allocation3 + $0xd8] sm:$0xff] %v728
    %761 = vst [vmem:[#allocation3 + $0xe0] sm:$0xff] %v729
    %762 = vst [vmem:[#allocation3 + $0xe8] sm:$0xff] %v730
    %763 = vst [vmem:[#allocation3 + $0xf0] sm:$0xff] %v731
    %764 = vst [vmem:[#allocation3 + $0xf8] sm:$0xff] %v732
    %v765 = vld [vmem:[#allocation2] sm:$0xff]
    %v766 = vld [vmem:[#allocation2 + $0x8] sm:$0xff]
    %v767 = vld [vmem:[#allocation2 + $0x10] sm:$0xff]
    %v768 = vld [vmem:[#allocation2 + $0x18] sm:$0xff]
    %v769 = vld [vmem:[#allocation2 + $0x20] sm:$0xff]
    %v770 = vld [vmem:[#allocation2 + $0x28] sm:$0xff]
    %v771 = vld [vmem:[#allocation2 + $0x30] sm:$0xff]
    %v772 = vld [vmem:[#allocation2 + $0x38] sm:$0xff]
    %v773 = vld [vmem:[#allocation2 + $0x40] sm:$0xff]
    %v774 = vld [vmem:[#allocation2 + $0x48] sm:$0xff]
    %v775 = vld [vmem:[#allocation2 + $0x50] sm:$0xff]
    %v776 = vld [vmem:[#allocation2 + $0x58] sm:$0xff]
    %v777 = vld [vmem:[#allocation2 + $0x60] sm:$0xff]
    %v778 = vld [vmem:[#allocation2 + $0x68] sm:$0xff]
    %v779 = vld [vmem:[#allocation2 + $0x70] sm:$0xff]
    %v780 = vld [vmem:[#allocation2 + $0x78] sm:$0xff]
    %v781 = vld [vmem:[#allocation2 + $0x80] sm:$0xff]
    %v782 = vld [vmem:[#allocation2 + $0x88] sm:$0xff]
    %v783 = vld [vmem:[#allocation2 + $0x90] sm:$0xff]
    %v784 = vld [vmem:[#allocation2 + $0x98] sm:$0xff]
    %v785 = vld [vmem:[#allocation2 + $0xa0] sm:$0xff]
    %v786 = vld [vmem:[#allocation2 + $0xa8] sm:$0xff]
    %v787 = vld [vmem:[#allocation2 + $0xb0] sm:$0xff]
    %v788 = vld [vmem:[#allocation2 + $0xb8] sm:$0xff]
    %v789 = vld [vmem:[#allocation2 + $0xc0] sm:$0xff]
    %v790 = vld [vmem:[#allocation2 + $0xc8] sm:$0xff]
    %v791 = vld [vmem:[#allocation2 + $0xd0] sm:$0xff]
    %v792 = vld [vmem:[#allocation2 + $0xd8] sm:$0xff]
    %v793 = vld [vmem:[#allocation2 + $0xe0] sm:$0xff]
    %v794 = vld [vmem:[#allocation2 + $0xe8] sm:$0xff]
    %v795 = vld [vmem:[#allocation2 + $0xf0] sm:$0xff]
    %v796 = vld [vmem:[#allocation2 + $0xf8] sm:$0xff]
    %v797 = vsel %vm637, %v573, %v765
    %v798 = vsel %vm638, %v574, %v766
    %v799 = vsel %vm639, %v575, %v767
    %v800 = vsel %vm640, %v576, %v768
    %v801 = vsel %vm641, %v577, %v769
    %v802 = vsel %vm642, %v578, %v770
    %v803 = vsel %vm643, %v579, %v771
    %v804 = vsel %vm644, %v580, %v772
    %v805 = vsel %vm645, %v581, %v773
    %v806 = vsel %vm646, %v582, %v774
    %v807 = vsel %vm647, %v583, %v775
    %v808 = vsel %vm648, %v584, %v776
    %v809 = vsel %vm649, %v585, %v777
    %v810 = vsel %vm650, %v586, %v778
    %v811 = vsel %vm651, %v587, %v779
    %v812 = vsel %vm652, %v588, %v780
    %v813 = vsel %vm653, %v589, %v781
    %v814 = vsel %vm654, %v590, %v782
    %v815 = vsel %vm655, %v591, %v783
    %v816 = vsel %vm656, %v592, %v784
    %v817 = vsel %vm657, %v593, %v785
    %v818 = vsel %vm658, %v594, %v786
    %v819 = vsel %vm659, %v595, %v787
    %v820 = vsel %vm660, %v596, %v788
    %v821 = vsel %vm661, %v597, %v789
    %v822 = vsel %vm662, %v598, %v790
    %v823 = vsel %vm663, %v599, %v791
    %v824 = vsel %vm664, %v600, %v792
    %v825 = vsel %vm665, %v601, %v793
    %v826 = vsel %vm666, %v602, %v794
    %v827 = vsel %vm667, %v603, %v795
    %v828 = vsel %vm668, %v604, %v796
    %829 = vst [vmem:[#allocation2] sm:$0xff] %v797
    %830 = vst [vmem:[#allocation2 + $0x8] sm:$0xff] %v798
    %831 = vst [vmem:[#allocation2 + $0x10] sm:$0xff] %v799
    %832 = vst [vmem:[#allocation2 + $0x18] sm:$0xff] %v800
    %833 = vst [vmem:[#allocation2 + $0x20] sm:$0xff] %v801
    %834 = vst [vmem:[#allocation2 + $0x28] sm:$0xff] %v802
    %835 = vst [vmem:[#allocation2 + $0x30] sm:$0xff] %v803
    %836 = vst [vmem:[#allocation2 + $0x38] sm:$0xff] %v804
    %837 = vst [vmem:[#allocation2 + $0x40] sm:$0xff] %v805
    %838 = vst [vmem:[#allocation2 + $0x48] sm:$0xff] %v806
    %839 = vst [vmem:[#allocation2 + $0x50] sm:$0xff] %v807
    %840 = vst [vmem:[#allocation2 + $0x58] sm:$0xff] %v808
    %841 = vst [vmem:[#allocation2 + $0x60] sm:$0xff] %v809
    %842 = vst [vmem:[#allocation2 + $0x68] sm:$0xff] %v810
    %843 = vst [vmem:[#allocation2 + $0x70] sm:$0xff] %v811
    %844 = vst [vmem:[#allocation2 + $0x78] sm:$0xff] %v812
    %845 = vst [vmem:[#allocation2 + $0x80] sm:$0xff] %v813
    %846 = vst [vmem:[#allocation2 + $0x88] sm:$0xff] %v814
    %847 = vst [vmem:[#allocation2 + $0x90] sm:$0xff] %v815
    %848 = vst [vmem:[#allocation2 + $0x98] sm:$0xff] %v816
    %849 = vst [vmem:[#allocation2 + $0xa0] sm:$0xff] %v817
    %850 = vst [vmem:[#allocation2 + $0xa8] sm:$0xff] %v818
    %851 = vst [vmem:[#allocation2 + $0xb0] sm:$0xff] %v819
    %852 = vst [vmem:[#allocation2 + $0xb8] sm:$0xff] %v820
    %853 = vst [vmem:[#allocation2 + $0xc0] sm:$0xff] %v821
    %854 = vst [vmem:[#allocation2 + $0xc8] sm:$0xff] %v822
    %855 = vst [vmem:[#allocation2 + $0xd0] sm:$0xff] %v823
    %856 = vst [vmem:[#allocation2 + $0xd8] sm:$0xff] %v824
    %857 = vst [vmem:[#allocation2 + $0xe0] sm:$0xff] %v825
    %858 = vst [vmem:[#allocation2 + $0xe8] sm:$0xff] %v826
    %859 = vst [vmem:[#allocation2 + $0xf0] sm:$0xff] %v827
    %860 = vst [vmem:[#allocation2 + $0xf8] sm:$0xff] %v828
    // Predicated region
    $region14: #{tpu_custom_call.1} parent=1 // pred_check
      %p861 = pneg %p47
    $region15: #{tpu_custom_call.1} parent=1 // pred_check_branch
      %863 = sbr.rel (%p861) target = $region17
    $region16: #{tpu_custom_call.1} parent=1 // pred_region
      %v864 = vld [vmem:[#allocation2] sm:$0xff]
      %v865 = vld [vmem:[#allocation2 + $0x8] sm:$0xff]
      %v866 = vld [vmem:[#allocation2 + $0x10] sm:$0xff]
      %v867 = vld [vmem:[#allocation2 + $0x18] sm:$0xff]
      %v868 = vld [vmem:[#allocation2 + $0x20] sm:$0xff]
      %v869 = vld [vmem:[#allocation2 + $0x28] sm:$0xff]
      %v870 = vld [vmem:[#allocation2 + $0x30] sm:$0xff]
      %v871 = vld [vmem:[#allocation2 + $0x38] sm:$0xff]
      %v872 = vld [vmem:[#allocation2 + $0x40] sm:$0xff]
      %v873 = vld [vmem:[#allocation2 + $0x48] sm:$0xff]
      %v874 = vld [vmem:[#allocation2 + $0x50] sm:$0xff]
      %v875 = vld [vmem:[#allocation2 + $0x58] sm:$0xff]
      %v876 = vld [vmem:[#allocation2 + $0x60] sm:$0xff]
      %v877 = vld [vmem:[#allocation2 + $0x68] sm:$0xff]
      %v878 = vld [vmem:[#allocation2 + $0x70] sm:$0xff]
      %v879 = vld [vmem:[#allocation2 + $0x78] sm:$0xff]
      %v880 = vld [vmem:[#allocation2 + $0x80] sm:$0xff]
      %v881 = vld [vmem:[#allocation2 + $0x88] sm:$0xff]
      %v882 = vld [vmem:[#allocation2 + $0x90] sm:$0xff]
      %v883 = vld [vmem:[#allocation2 + $0x98] sm:$0xff]
      %v884 = vld [vmem:[#allocation2 + $0xa0] sm:$0xff]
      %v885 = vld [vmem:[#allocation2 + $0xa8] sm:$0xff]
      %v886 = vld [vmem:[#allocation2 + $0xb0] sm:$0xff]
      %v887 = vld [vmem:[#allocation2 + $0xb8] sm:$0xff]
      %v888 = vld [vmem:[#allocation2 + $0xc0] sm:$0xff]
      %v889 = vld [vmem:[#allocation2 + $0xc8] sm:$0xff]
      %v890 = vld [vmem:[#allocation2 + $0xd0] sm:$0xff]
      %v891 = vld [vmem:[#allocation2 + $0xd8] sm:$0xff]
      %v892 = vld [vmem:[#allocation2 + $0xe0] sm:$0xff]
      %v893 = vld [vmem:[#allocation2 + $0xe8] sm:$0xff]
      %v894 = vld [vmem:[#allocation2 + $0xf0] sm:$0xff]
      %v895 = vld [vmem:[#allocation2 + $0xf8] sm:$0xff]
      %v896 = vld [vmem:[#allocation3] sm:$0xff]
      %v897 = vld [vmem:[#allocation3 + $0x8] sm:$0xff]
      %v898 = vld [vmem:[#allocation3 + $0x10] sm:$0xff]
      %v899 = vld [vmem:[#allocation3 + $0x18] sm:$0xff]
      %v900 = vld [vmem:[#allocation3 + $0x20] sm:$0xff]
      %v901 = vld [vmem:[#allocation3 + $0x28] sm:$0xff]
      %v902 = vld [vmem:[#allocation3 + $0x30] sm:$0xff]
      %v903 = vld [vmem:[#allocation3 + $0x38] sm:$0xff]
      %v904 = vld [vmem:[#allocation3 + $0x40] sm:$0xff]
      %v905 = vld [vmem:[#allocation3 + $0x48] sm:$0xff]
      %v906 = vld [vmem:[#allocation3 + $0x50] sm:$0xff]
      %v907 = vld [vmem:[#allocation3 + $0x58] sm:$0xff]
      %v908 = vld [vmem:[#allocation3 + $0x60] sm:$0xff]
      %v909 = vld [vmem:[#allocation3 + $0x68] sm:$0xff]
      %v910 = vld [vmem:[#allocation3 + $0x70] sm:$0xff]
      %v911 = vld [vmem:[#allocation3 + $0x78] sm:$0xff]
      %v912 = vld [vmem:[#allocation3 + $0x80] sm:$0xff]
      %v913 = vld [vmem:[#allocation3 + $0x88] sm:$0xff]
      %v914 = vld [vmem:[#allocation3 + $0x90] sm:$0xff]
      %v915 = vld [vmem:[#allocation3 + $0x98] sm:$0xff]
      %v916 = vld [vmem:[#allocation3 + $0xa0] sm:$0xff]
      %v917 = vld [vmem:[#allocation3 + $0xa8] sm:$0xff]
      %v918 = vld [vmem:[#allocation3 + $0xb0] sm:$0xff]
      %v919 = vld [vmem:[#allocation3 + $0xb8] sm:$0xff]
      %v920 = vld [vmem:[#allocation3 + $0xc0] sm:$0xff]
      %v921 = vld [vmem:[#allocation3 + $0xc8] sm:$0xff]
      %v922 = vld [vmem:[#allocation3 + $0xd0] sm:$0xff]
      %v923 = vld [vmem:[#allocation3 + $0xd8] sm:$0xff]
      %v924 = vld [vmem:[#allocation3 + $0xe0] sm:$0xff]
      %v925 = vld [vmem:[#allocation3 + $0xe8] sm:$0xff]
      %v926 = vld [vmem:[#allocation3 + $0xf0] sm:$0xff]
      %v927 = vld [vmem:[#allocation3 + $0xf8] sm:$0xff]
      %v928 = vmax.f32 %v864, %v868
      %v929 = vmax.f32 %v865, %v869
      %v930 = vmax.f32 %v866, %v870
      %v931 = vmax.f32 %v867, %v871
      %v932 = vmax.f32 %v928, %v872
      %v933 = vmax.f32 %v929, %v873
      %v934 = vmax.f32 %v930, %v874
      %v935 = vmax.f32 %v931, %v875
      %v936 = vmax.f32 %v932, %v876
      %v937 = vmax.f32 %v933, %v877
      %v938 = vmax.f32 %v934, %v878
      %v939 = vmax.f32 %v935, %v879
      %v940 = vmax.f32 %v936, %v880
      %v941 = vmax.f32 %v937, %v881
      %v942 = vmax.f32 %v938, %v882
      %v943 = vmax.f32 %v939, %v883
      %v944 = vmax.f32 %v940, %v884
      %v945 = vmax.f32 %v941, %v885
      %v946 = vmax.f32 %v942, %v886
      %v947 = vmax.f32 %v943, %v887
      %v948 = vmax.f32 %v944, %v888
      %v949 = vmax.f32 %v945, %v889
      %v950 = vmax.f32 %v946, %v890
      %v951 = vmax.f32 %v947, %v891
      %v952 = vmax.f32 %v948, %v892
      %v953 = vmax.f32 %v949, %v893
      %v954 = vmax.f32 %v950, %v894
      %v955 = vmax.f32 %v951, %v895
      %v956 = vmax.f32 %v952, %v953
      %v957 = vmax.f32 %v954, %v955
      %v958 = vmax.f32 %v956, %v957
      %959 = vmax.xlane.f32.xlu0 %v958
      %v960 = vpop.xlane.xlu0 %959
      %v961 = vrot.slane %v960, 4
      %v962 = vmax.f32 %v960, %v961
      %v963 = vrot.slane %v962, 2
      %v964 = vmax.f32 %v962, %v963
      %v965 = vrot.slane %v964, 1
      %v966 = vmax.f32 %v964, %v965
      %s967 = vtos %v966
      %v968 = vstv %s967
      %vm969 = vcmp.eq.f32.partialorder %v864, %v968
      %vm970 = vcmp.eq.f32.partialorder %v865, %v968
      %vm971 = vcmp.eq.f32.partialorder %v866, %v968
      %vm972 = vcmp.eq.f32.partialorder %v867, %v968
      %vm973 = vcmp.eq.f32.partialorder %v868, %v968
      %vm974 = vcmp.eq.f32.partialorder %v869, %v968
      %vm975 = vcmp.eq.f32.partialorder %v870, %v968
      %vm976 = vcmp.eq.f32.partialorder %v871, %v968
      %vm977 = vcmp.eq.f32.partialorder %v872, %v968
      %vm978 = vcmp.eq.f32.partialorder %v873, %v968
      %vm979 = vcmp.eq.f32.partialorder %v874, %v968
      %vm980 = vcmp.eq.f32.partialorder %v875, %v968
      %vm981 = vcmp.eq.f32.partialorder %v876, %v968
      %vm982 = vcmp.eq.f32.partialorder %v877, %v968
      %vm983 = vcmp.eq.f32.partialorder %v878, %v968
      %vm984 = vcmp.eq.f32.partialorder %v879, %v968
      %vm985 = vcmp.eq.f32.partialorder %v880, %v968
      %vm986 = vcmp.eq.f32.partialorder %v881, %v968
      %vm987 = vcmp.eq.f32.partialorder %v882, %v968
      %vm988 = vcmp.eq.f32.partialorder %v883, %v968
      %vm989 = vcmp.eq.f32.partialorder %v884, %v968
      %vm990 = vcmp.eq.f32.partialorder %v885, %v968
      %vm991 = vcmp.eq.f32.partialorder %v886, %v968
      %vm992 = vcmp.eq.f32.partialorder %v887, %v968
      %vm993 = vcmp.eq.f32.partialorder %v888, %v968
      %vm994 = vcmp.eq.f32.partialorder %v889, %v968
      %vm995 = vcmp.eq.f32.partialorder %v890, %v968
      %vm996 = vcmp.eq.f32.partialorder %v891, %v968
      %vm997 = vcmp.eq.f32.partialorder %v892, %v968
      %vm998 = vcmp.eq.f32.partialorder %v893, %v968
      %vm999 = vcmp.eq.f32.partialorder %v894, %v968
      %vm1000 = vcmp.eq.f32.partialorder %v895, %v968
      %v1001 = vsel %vm969, %v896, 256
      %v1002 = vsel %vm970, %v897, 256
      %v1003 = vsel %vm971, %v898, 256
      %v1004 = vsel %vm972, %v899, 256
      %v1005 = vsel %vm973, %v900, 256
      %v1006 = vsel %vm974, %v901, 256
      %v1007 = vsel %vm975, %v902, 256
      %v1008 = vsel %vm976, %v903, 256
      %v1009 = vsel %vm977, %v904, 256
      %v1010 = vsel %vm978, %v905, 256
      %v1011 = vsel %vm979, %v906, 256
      %v1012 = vsel %vm980, %v907, 256
      %v1013 = vsel %vm981, %v908, 256
      %v1014 = vsel %vm982, %v909, 256
      %v1015 = vsel %vm983, %v910, 256
      %v1016 = vsel %vm984, %v911, 256
      %v1017 = vsel %vm985, %v912, 256
      %v1018 = vsel %vm986, %v913, 256
      %v1019 = vsel %vm987, %v914, 256
      %v1020 = vsel %vm988, %v915, 256
      %v1021 = vsel %vm989, %v916, 256
      %v1022 = vsel %vm990, %v917, 256
      %v1023 = vsel %vm991, %v918, 256
      %v1024 = vsel %vm992, %v919, 256
      %v1025 = vsel %vm993, %v920, 256
      %v1026 = vsel %vm994, %v921, 256
      %v1027 = vsel %vm995, %v922, 256
      %v1028 = vsel %vm996, %v923, 256
      %v1029 = vsel %vm997, %v924, 256
      %v1030 = vsel %vm998, %v925, 256
      %v1031 = vsel %vm999, %v926, 256
      %v1032 = vsel %vm1000, %v927, 256
      %vm1033 = vcmp.lt.s32.totalorder %v1001, %v1005
      %v1034 = vsel %vm1033, %v1001, %v1005
      %vm1035 = vcmp.lt.s32.totalorder %v1002, %v1006
      %v1036 = vsel %vm1035, %v1002, %v1006
      %vm1037 = vcmp.lt.s32.totalorder %v1003, %v1007
      %v1038 = vsel %vm1037, %v1003, %v1007
      %vm1039 = vcmp.lt.s32.totalorder %v1004, %v1008
      %v1040 = vsel %vm1039, %v1004, %v1008
      %vm1041 = vcmp.lt.s32.totalorder %v1034, %v1009
      %v1042 = vsel %vm1041, %v1034, %v1009
      %vm1043 = vcmp.lt.s32.totalorder %v1036, %v1010
      %v1044 = vsel %vm1043, %v1036, %v1010
      %vm1045 = vcmp.lt.s32.totalorder %v1038, %v1011
      %v1046 = vsel %vm1045, %v1038, %v1011
      %vm1047 = vcmp.lt.s32.totalorder %v1040, %v1012
      %v1048 = vsel %vm1047, %v1040, %v1012
      %vm1049 = vcmp.lt.s32.totalorder %v1042, %v1013
      %v1050 = vsel %vm1049, %v1042, %v1013
      %vm1051 = vcmp.lt.s32.totalorder %v1044, %v1014
      %v1052 = vsel %vm1051, %v1044, %v1014
      %vm1053 = vcmp.lt.s32.totalorder %v1046, %v1015
      %v1054 = vsel %vm1053, %v1046, %v1015
      %vm1055 = vcmp.lt.s32.totalorder %v1048, %v1016
      %v1056 = vsel %vm1055, %v1048, %v1016
      %vm1057 = vcmp.lt.s32.totalorder %v1050, %v1017
      %v1058 = vsel %vm1057, %v1050, %v1017
      %vm1059 = vcmp.lt.s32.totalorder %v1052, %v1018
      %v1060 = vsel %vm1059, %v1052, %v1018
      %vm1061 = vcmp.lt.s32.totalorder %v1054, %v1019
      %v1062 = vsel %vm1061, %v1054, %v1019
      %vm1063 = vcmp.lt.s32.totalorder %v1056, %v1020
      %v1064 = vsel %vm1063, %v1056, %v1020
      %vm1065 = vcmp.lt.s32.totalorder %v1058, %v1021
      %v1066 = vsel %vm1065, %v1058, %v1021
      %vm1067 = vcmp.lt.s32.totalorder %v1060, %v1022
      %v1068 = vsel %vm1067, %v1060, %v1022
      %vm1069 = vcmp.lt.s32.totalorder %v1062, %v1023
      %v1070 = vsel %vm1069, %v1062, %v1023
      %vm1071 = vcmp.lt.s32.totalorder %v1064, %v1024
      %v1072 = vsel %vm1071, %v1064, %v1024
      %vm1073 = vcmp.lt.s32.totalorder %v1066, %v1025
      %v1074 = vsel %vm1073, %v1066, %v1025
      %vm1075 = vcmp.lt.s32.totalorder %v1068, %v1026
      %v1076 = vsel %vm1075, %v1068, %v1026
      %vm1077 = vcmp.lt.s32.totalorder %v1070, %v1027
      %v1078 = vsel %vm1077, %v1070, %v1027
      %vm1079 = vcmp.lt.s32.totalorder %v1072, %v1028
      %v1080 = vsel %vm1079, %v1072, %v1028
      %vm1081 = vcmp.lt.s32.totalorder %v1074, %v1029
      %v1082 = vsel %vm1081, %v1074, %v1029
      %vm1083 = vcmp.lt.s32.totalorder %v1076, %v1030
      %v1084 = vsel %vm1083, %v1076, %v1030
      %vm1085 = vcmp.lt.s32.totalorder %v1078, %v1031
      %v1086 = vsel %vm1085, %v1078, %v1031
      %vm1087 = vcmp.lt.s32.totalorder %v1080, %v1032
      %v1088 = vsel %vm1087, %v1080, %v1032
      %vm1089 = vcmp.lt.s32.totalorder %v1082, %v1084
      %v1090 = vsel %vm1089, %v1082, %v1084
      %vm1091 = vcmp.lt.s32.totalorder %v1086, %v1088
      %v1092 = vsel %vm1091, %v1086, %v1088
      %vm1093 = vcmp.lt.s32.totalorder %v1090, %v1092
      %v1094 = vsel %vm1093, %v1090, %v1092
      %v1095 = vand.u32 %v1094, 65535
      %v1096 = vshra.s32 %v1094, 16
      %v1097 = vcvt.s32.f32 %v1095
      %v1098 = vcvt.s32.f32 %v1096
      %1099 = vmin.xlane.f32.xlu0 %v1098
      %v1100 = vpop.xlane.xlu0 %1099
      %vm1101 = vcmp.eq.f32.partialorder %v1098, %v1100
      %v1102 = vsel %vm1101, %v1097, inf
      %1103 = vmin.xlane.f32.xlu0 %v1102
      %v1104 = vpop.xlane.xlu0 %1103
      %v1105 = vcvt.f32.s32 %v1104
      %v1106 = vcvt.f32.s32 %v1100
      %v1107 = vshll.u32 %v1106, 16
      %v1108 = vadd.s32 %v1107, %v1105
      %v1109 = vrot.slane %v1108, 4
      %vm1110 = vcmp.lt.s32.totalorder %v1108, %v1109
      %v1111 = vsel %vm1110, %v1108, %v1109
      %v1112 = vrot.slane %v1111, 2
      %vm1113 = vcmp.lt.s32.totalorder %v1111, %v1112
      %v1114 = vsel %vm1113, %v1111, %v1112
      %v1115 = vrot.slane %v1114, 1
      %vm1116 = vcmp.lt.s32.totalorder %v1114, %v1115
      %v1117 = vsel %vm1116, %v1114, %v1115
      %s1118 = vtos %v1117
      %p1119 = scmp.lt.s32.totalorder %s1118, 255
      %s1120 = scalar_select %p1119, %s1118, 255
      %1121 = vst [vmem:[#allocation4] sm:$0xff] %v968
      %v1122 = vstv %s1120
      %1123 = vst [vmem:[#allocation6] sm:$0xff] %v1122
    $region17: #{tpu_custom_call.1} parent=1 // pred_fallthru
      _
    // Predicated region
    $region18: #{tpu_custom_call.1} parent=1 // pred_check
      _
    $region19: #{tpu_custom_call.1} parent=1 // pred_check_branch
      %1125 = sbr.rel (0) target = $region21
    $region20: #{tpu_custom_call.1} parent=1 // pred_region
      %s1127 = ssub.s32 128, 128
      %1128 = vsyncadd [#allocation5], %s1127
      %s1130 = sshll.u32 [#allocation4], 4
      %s1131 = int_to_ptr.vmem [resolvable:$true] %s1130
      %1133 = dma.vmem_to_hbm [thread:$0]  %s1131, 128, %s2, [#allocation5]
    $region21: #{tpu_custom_call.1} parent=1 // pred_fallthru
      _
    // Predicated region
    $region22: #{tpu_custom_call.1} parent=1 // pred_check
      _
    $region23: #{tpu_custom_call.1} parent=1 // pred_check_branch
      %1135 = sbr.rel (0) target = $region25
    $region24: #{tpu_custom_call.1} parent=1 // pred_region
      %s1137 = ssub.s32 128, 128
      %1138 = vsyncadd [#allocation7], %s1137
      %s1140 = sshll.u32 [#allocation6], 4
      %s1141 = int_to_ptr.vmem [resolvable:$true] %s1140
      %1143 = dma.vmem_to_hbm [thread:$0]  %s1141, 128, %s3, [#allocation7]
    $region25: #{tpu_custom_call.1} parent=1 // pred_fallthru
      _
    // Predicated region
    $region26: #{tpu_custom_call.1} parent=1 // pred_check
      _
    $region27: #{tpu_custom_call.1} parent=1 // pred_check_branch
      %1145 = sbr.rel (0) target = $region29
    $region28: #{tpu_custom_call.1} parent=1 // pred_region
      %1146 = dma.done [#allocation5], 128
    $region29: #{tpu_custom_call.1} parent=1 // pred_fallthru
      _
    // Predicated region
    $region30: #{tpu_custom_call.1} parent=1 // pred_check
      _
    $region31: #{tpu_custom_call.1} parent=1 // pred_check_branch
      %1148 = sbr.rel (0) target = $region33
    $region32: #{tpu_custom_call.1} parent=1 // pred_region
      %1149 = dma.done [#allocation7], 128
    $region33: #{tpu_custom_call.1} parent=1 // pred_fallthru
      _
    %1150 = vsyncpa [#allocation5], 1
    %1151 = vsyncpa [#allocation7], 1

</llo_original>
